<compile_context>
chip_gen: v5e
topology: v5e:2x2
jax: 0.10.0
libtpu: 0.0.40
codegen_flags: <defaults>
</compile_context>

<pallas_src>
import functools

import jax
import jax.numpy as jnp
from jax.experimental import pallas as pl
from jax.experimental.pallas import tpu as pltpu

REPARAM_NOISE = 1e-8
HP = 128                 # lane width / padded feature width
HIDDEN = 36              # fc1/fc2 width (from the PyTorch module)
P_ROWS = 3 * HP + 16     # 3 weight tiles + a 16-row (bf16-tile aligned) bias block


def _round_up(x, m):
    return ((x + m - 1) // m) * m


def build_param_slab(params):
    """Pack (w1,b1,w2,b2,w3,b3) into ONE resident (P_ROWS, 128) bf16 slab.

    Row layout: [0,128) w1, [128,256) w2, [256,384) w3 (each zero-padded to
    128x128), row 384 b1, row 385 b2, row 386 b3 (pad lanes = -1e30 so the
    128-lane softmax is exact).  Build this once at init and reuse it for
    every forward call.
    """
    w1, b1, w2, b2, w3, b3 = params
    D = w1.shape[0]
    A = w3.shape[1]
    assert D <= HP - 2
    assert w1.shape[1] == HIDDEN and w2.shape == (HIDDEN, HIDDEN)
    assert w3.shape[0] == HIDDEN
    p = jnp.zeros((P_ROWS, HP), jnp.float32)
    p = p.at[0:D, 0:HIDDEN].set(w1.astype(jnp.float32))
    p = p.at[HP:HP + HIDDEN, 0:HIDDEN].set(w2.astype(jnp.float32))
    p = p.at[2 * HP:2 * HP + HIDDEN, 0:A].set(w3.astype(jnp.float32))
    p = p.at[3 * HP + 0, 0:HIDDEN].set(b1.reshape(-1).astype(jnp.float32))
    p = p.at[3 * HP + 1, 0:HIDDEN].set(b2.reshape(-1).astype(jnp.float32))
    p = p.at[3 * HP + 2, :].set(jnp.float32(-1e30))
    p = p.at[3 * HP + 2, 0:A].set(b3.reshape(-1).astype(jnp.float32))
    return p.astype(jnp.bfloat16)


def _actor_kernel(x_ref, p_ref, o_ref, *, n_actions):
    A = n_actions
    x = x_ref[...]                                    # (TB, 128) f32
    u_col = x[:, HP - 1:HP]                           # (TB, 1) uniform sample

    # Static, aligned views into the single resident bf16 parameter slab.
    w1v = p_ref[0:HP, :]                              # (128, 128) bf16
    w2v = p_ref[HP:2 * HP, :]
    w3v = p_ref[2 * HP:3 * HP, :]
    bias = p_ref[3 * HP:3 * HP + 16, :].astype(jnp.float32)   # (16, 128)
    b1v = bias[0:1, :]
    b2v = bias[1:2, :]
    b3v = bias[2:3, :]                                # -1e30 in pad lanes

    # MLP: bf16 x bf16 -> f32 single-tile MXU matmuls; bias/ReLU in f32.
    h1 = jnp.maximum(
        jnp.dot(x.astype(jnp.bfloat16), w1v,
                preferred_element_type=jnp.float32) + b1v, 0.0)
    h2 = jnp.maximum(
        jnp.dot(h1.astype(jnp.bfloat16), w2v,
                preferred_element_type=jnp.float32) + b2v, 0.0)
    logits = jnp.dot(h2.astype(jnp.bfloat16), w3v,
                     preferred_element_type=jnp.float32) + b3v
    # Pad lanes of `logits` are ~ -1e30, so exp() underflows to exactly 0.

    # softmax + log_softmax from the SAME exact denom (so probs == exp(logp)).
    m = jnp.max(logits, axis=1, keepdims=True)
    shifted = logits - m
    e = jnp.exp(shifted)
    denom = jnp.sum(e, axis=1, keepdims=True)
    probs = e / denom                                 # pad lanes stay exactly 0
    logp = shifted - jnp.log(denom)
    # PyTorch reparam guard: log(probs + (probs==0)*1e-8)
    logp = jnp.where(probs == 0.0, jnp.log(jnp.float32(REPARAM_NOISE)), logp)

    # Categorical sample via inverse CDF: ceil(log2(A))-step Hillis-Steele
    # lane prefix sum (XLU rolls).  Wrapped-in lanes contribute exact zeros
    # because probs' pad lanes are 0 and A <= 40 keeps the wrap reach inside
    # the pad region.
    lane = jax.lax.broadcasted_iota(jnp.int32, (x.shape[0], HP), 1)
    valid = lane < A
    cdf = probs
    s = 1
    while s < A:                                      # unrolled at trace time
        cdf = cdf + pltpu.roll(cdf, s, 1)
        s *= 2
    below = jnp.where(valid & (cdf < u_col), 1.0, 0.0)
    action = jnp.minimum(jnp.sum(below, axis=1, keepdims=True),
                         jnp.float32(A - 1))

    # Pack into one lane-dense (TB, 128) slab:
    #   lanes [0,A): probs (already 0 elsewhere), lanes [A,2A): logp,
    #   lane 2A: action (as f32) via a single one-lane store.
    o_ref[...] = probs + pltpu.roll(jnp.where(valid, logp, 0.0), A, 1)
    o_ref[:, 2 * A:2 * A + 1] = action


def actor_forward(state, param_slab, u, *, n_actions, block_b=1024):
    """state: (B, input_dims) f32; param_slab: (P_ROWS, 128) bf16 from
    build_param_slab(); u: (B, 1) uniform(0,1) f32.

    Returns (action (B,1) int32, action_probs (B,A) f32, log_action_probs (B,A) f32).
    """
    B, D = state.shape
    A = int(n_actions)
    assert param_slab.shape == (P_ROWS, HP) and param_slab.dtype == jnp.bfloat16
    assert D <= HP - 2, "input_dims must leave a spare lane for the uniform sample"
    assert 1 <= A <= 40, "n_actions too large for the packed/scan layout"

    # ---- batch tile: grid >= 2 whenever possible (v7x megacore), tile <= block_b
    B8 = _round_up(B, 8)
    if B8 >= 16:
        TB = min(_round_up(block_b, 8), _round_up(pl.cdiv(B8, 2), 8))
    else:
        TB = B8
    B_pad = _round_up(B8, TB)
    grid = (B_pad // TB,)

    # ---- input slab: state | zeros | u  (one lane-dense (B_pad, 128) block)
    x_slab = jnp.concatenate(
        [state.astype(jnp.float32),
         jnp.zeros((B, HP - 1 - D), jnp.float32),
         u.reshape(B, 1).astype(jnp.float32)], axis=1)
    x_slab = jnp.pad(x_slab, ((0, B_pad - B), (0, 0)))

    kernel = functools.partial(_actor_kernel, n_actions=A)

    packed = pl.pallas_call(
        kernel,
        out_shape=jax.ShapeDtypeStruct((B_pad, HP), jnp.float32),
        grid=grid,
        in_specs=[
            pl.BlockSpec((TB, HP), lambda i: (i, 0)),       # activations
            pl.BlockSpec((P_ROWS, HP), lambda i: (0, 0)),   # resident bf16 params
        ],
        out_specs=pl.BlockSpec((TB, HP), lambda i: (i, 0)),
        compiler_params=pltpu.CompilerParams(
            dimension_semantics=("parallel",)),
    )(x_slab, param_slab)

    probs = packed[:B, 0:A]
    logp = packed[:B, A:2 * A]
    action = packed[:B, 2 * A:2 * A + 1].astype(jnp.int32)
    return action, probs, logp


def init_params(key, input_dims, n_actions):
    """Deterministic init mimicking nn.Linear's U(-1/sqrt(fan_in), 1/sqrt(fan_in)).

    Weights stored as (in, out) = PyTorch (out, in) transposed; biases as (1, out).
    """
    dims = [(input_dims, HIDDEN), (HIDDEN, HIDDEN), (HIDDEN, n_actions)]
    params = []
    for fan_in, fan_out in dims:
        key, kw, kb = jax.random.split(key, 3)
        bound = 1.0 / jnp.sqrt(jnp.float32(fan_in))
        w = jax.random.uniform(kw, (fan_in, fan_out), jnp.float32, -bound, bound)
        b = jax.random.uniform(kb, (1, fan_out), jnp.float32, -bound, bound)
        params += [w, b]
    return tuple(params)


def ref_forward(state, params, u):
    """Pure-JAX reference of the PyTorch forward (inverse-CDF sampling).

    Mirrors the kernel's bf16 matmul precision (weights/activations cast to
    bf16, f32 accumulation) so probs/logp/action comparisons are tight;
    softmax, log and sampling are f32 like the original module.
    """
    w1, b1, w2, b2, w3, b3 = params

    def lin(x, w, b):
        y = jnp.dot(x.astype(jnp.bfloat16), w.astype(jnp.bfloat16),
                    preferred_element_type=jnp.float32)
        return y + b.astype(jnp.bfloat16).astype(jnp.float32)

    h1 = jnp.maximum(lin(state, w1, b1), 0.0)
    h2 = jnp.maximum(lin(h1, w2, b2), 0.0)
    logits = lin(h2, w3, b3)
    probs = jax.nn.softmax(logits, axis=-1)
    z = jnp.where(probs == 0.0, REPARAM_NOISE, 0.0)
    logp = jnp.log(probs + z)
    cdf = jnp.cumsum(probs, axis=-1)
    action = jnp.sum((cdf < u).astype(jnp.int32), axis=-1, keepdims=True)
    action = jnp.minimum(action, probs.shape[-1] - 1)
    return action, probs, logp


if __name__ == "__main__":
    B = 8
    INPUT_DIMS = 8
    N_ACTIONS = 4

    root = jax.random.PRNGKey(0)
    k_param, k_state, k_u = jax.random.split(root, 3)

    params = init_params(k_param, INPUT_DIMS, N_ACTIONS)
    state = jax.random.normal(k_state, (B, INPUT_DIMS), dtype=jnp.float32)
    u = jax.random.uniform(k_u, (B, 1), dtype=jnp.float32)

    # Build the resident parameter slab ONCE (outside the per-step hot path).
    param_slab = jax.block_until_ready(build_param_slab(params))

    fwd = jax.jit(actor_forward, static_argnames=("n_actions", "block_b"))
    action, action_probs, log_action_probs = fwd(
        state, param_slab, u, n_actions=N_ACTIONS)
    jax.block_until_ready((action, action_probs, log_action_probs))

    # Sanity checks against a pure-JAX reference (same bf16 matmul precision).
    ref_a, ref_p, ref_lp = ref_forward(state, params, u)
    assert action.shape == (B, 1)
    assert action_probs.shape == (B, N_ACTIONS)
    assert log_action_probs.shape == (B, N_ACTIONS)
    assert bool(jnp.all(jnp.abs(jnp.sum(action_probs, axis=-1) - 1.0) < 1e-3))
    assert bool(jnp.allclose(action_probs, ref_p, atol=5e-3))
    assert bool(jnp.allclose(log_action_probs, ref_lp, atol=5e-3))
    assert bool(jnp.allclose(jnp.exp(log_action_probs), action_probs, atol=5e-3))
    assert bool(jnp.all((action >= 0) & (action < N_ACTIONS)))
    assert bool(jnp.all(action == ref_a))

    print("KERNEL_OK")
</pallas_src>

<mosaic_0001>
module attributes {stable_mosaic.version = 11 : i64} {
  func.func @_actor_kernel(%arg0: i32, %arg1: memref<8x128xf32, #tpu.memory_space<vmem>>, %arg2: memref<400x128xbf16, #tpu.memory_space<vmem>>, %arg3: memref<8x128xf32, #tpu.memory_space<vmem>>) attributes {dimension_semantics = [#tpu.dimension_semantics<parallel>], iteration_bounds = array<i64: 1>, scalar_prefetch = 0 : i64, scratch_operands = 0 : i64, tpu.core_type = #tpu.core_type<tc>, window_params = [{transform_indices = @transform_0, window_bounds = array<i64: 8, 128>}, {pipeline_mode = #tpu.pipeline_mode<synchronous>, transform_indices = @transform_1, window_bounds = array<i64: 400, 128>}, {transform_indices = @transform_2, window_bounds = array<i64: 8, 128>}]} {
    %c0 = arith.constant 0 : index
    %c0_0 = arith.constant 0 : index
    %0 = vector.load %arg1[%c0, %c0_0] : memref<8x128xf32, #tpu.memory_space<vmem>>, vector<8x128xf32>
    %1 = vector.extract_strided_slice %0 {offsets = [0, 127], sizes = [8, 1], strides = [1, 1]} : vector<8x128xf32> to vector<8x1xf32>
    %c0_1 = arith.constant 0 : index
    %c0_2 = arith.constant 0 : index
    %2 = vector.load %arg2[%c0_1, %c0_2] : memref<400x128xbf16, #tpu.memory_space<vmem>>, vector<128x128xbf16>
    %c128 = arith.constant 128 : index
    %c0_3 = arith.constant 0 : index
    %3 = vector.load %arg2[%c128, %c0_3] : memref<400x128xbf16, #tpu.memory_space<vmem>>, vector<128x128xbf16>
    %c256 = arith.constant 256 : index
    %c0_4 = arith.constant 0 : index
    %4 = vector.load %arg2[%c256, %c0_4] : memref<400x128xbf16, #tpu.memory_space<vmem>>, vector<128x128xbf16>
    %c384 = arith.constant 384 : index
    %c0_5 = arith.constant 0 : index
    %5 = vector.load %arg2[%c384, %c0_5] : memref<400x128xbf16, #tpu.memory_space<vmem>>, vector<16x128xbf16>
    %6 = arith.extf %5 : vector<16x128xbf16> to vector<16x128xf32>
    %7 = vector.extract_strided_slice %6 {offsets = [0, 0], sizes = [1, 128], strides = [1, 1]} : vector<16x128xf32> to vector<1x128xf32>
    %8 = vector.extract_strided_slice %6 {offsets = [1, 0], sizes = [1, 128], strides = [1, 1]} : vector<16x128xf32> to vector<1x128xf32>
    %9 = vector.extract_strided_slice %6 {offsets = [2, 0], sizes = [1, 128], strides = [1, 1]} : vector<16x128xf32> to vector<1x128xf32>
    %10 = arith.truncf %0 : vector<8x128xf32> to vector<8x128xbf16>
    %cst = arith.constant dense<0.000000e+00> : vector<8x128xf32>
    %11 = tpu.matmul %10, %2, %cst {dimension_numbers = #tpu.dot_dimension_numbers<[1], [0], [0], [1], [0, 0, 1, 1], [], []>} : vector<8x128xbf16>, vector<128x128xbf16>, vector<8x128xf32> -> vector<8x128xf32>
    %12 = vector.broadcast %7 : vector<1x128xf32> to vector<8x128xf32>
    %13 = arith.addf %11, %12 : vector<8x128xf32>
    %cst_6 = arith.constant 0.000000e+00 : f32
    %14 = vector.broadcast %cst_6 : f32 to vector<8x128xf32>
    %15 = arith.maximumf %13, %14 : vector<8x128xf32>
    %16 = arith.truncf %15 : vector<8x128xf32> to vector<8x128xbf16>
    %cst_7 = arith.constant dense<0.000000e+00> : vector<8x128xf32>
    %17 = tpu.matmul %16, %3, %cst_7 {dimension_numbers = #tpu.dot_dimension_numbers<[1], [0], [0], [1], [0, 0, 1, 1], [], []>} : vector<8x128xbf16>, vector<128x128xbf16>, vector<8x128xf32> -> vector<8x128xf32>
    %18 = vector.broadcast %8 : vector<1x128xf32> to vector<8x128xf32>
    %19 = arith.addf %17, %18 : vector<8x128xf32>
    %cst_8 = arith.constant 0.000000e+00 : f32
    %20 = vector.broadcast %cst_8 : f32 to vector<8x128xf32>
    %21 = arith.maximumf %19, %20 : vector<8x128xf32>
    %22 = arith.truncf %21 : vector<8x128xf32> to vector<8x128xbf16>
    %cst_9 = arith.constant dense<0.000000e+00> : vector<8x128xf32>
    %23 = tpu.matmul %22, %4, %cst_9 {dimension_numbers = #tpu.dot_dimension_numbers<[1], [0], [0], [1], [0, 0, 1, 1], [], []>} : vector<8x128xbf16>, vector<128x128xbf16>, vector<8x128xf32> -> vector<8x128xf32>
    %24 = vector.broadcast %9 : vector<1x128xf32> to vector<8x128xf32>
    %25 = arith.addf %23, %24 : vector<8x128xf32>
    %cst_10 = arith.constant dense<0xFF800000> : vector<8xf32>
    %26 = vector.multi_reduction <maximumf>, %25, %cst_10 [1] : vector<8x128xf32> to vector<8xf32>
    %27 = vector.shape_cast %26 : vector<8xf32> to vector<8x1xf32>
    %28 = vector.broadcast %27 : vector<8x1xf32> to vector<8x128xf32>
    %29 = arith.subf %25, %28 : vector<8x128xf32>
    %30 = math.exp %29 : vector<8x128xf32>
    %cst_11 = arith.constant dense<0.000000e+00> : vector<8xf32>
    %31 = vector.multi_reduction <add>, %30, %cst_11 [1] : vector<8x128xf32> to vector<8xf32>
    %32 = vector.shape_cast %31 : vector<8xf32> to vector<8x1xf32>
    %33 = vector.broadcast %32 : vector<8x1xf32> to vector<8x128xf32>
    %34 = arith.divf %30, %33 : vector<8x128xf32>
    %35 = math.log %32 : vector<8x1xf32>
    %36 = vector.broadcast %35 : vector<8x1xf32> to vector<8x128xf32>
    %37 = arith.subf %29, %36 : vector<8x128xf32>
    %cst_12 = arith.constant 0.000000e+00 : f32
    %38 = vector.broadcast %cst_12 : f32 to vector<8x128xf32>
    %39 = arith.cmpf oeq, %34, %38 : vector<8x128xf32>
    %cst_13 = arith.constant 9.99999993E-9 : f32
    %40 = math.log %cst_13 : f32
    %41 = vector.broadcast %40 : f32 to vector<8x128xf32>
    %42 = arith.select %39, %41, %37 : vector<8x128xi1>, vector<8x128xf32>
    %43 = tpu.iota {dimensions = array<i32: 1>} : vector<8x128xi32>
    %c4_i32 = arith.constant 4 : i32
    %44 = vector.broadcast %c4_i32 : i32 to vector<8x128xi32>
    %45 = arith.cmpi slt, %43, %44 : vector<8x128xi32>
    %c1_i32 = arith.constant 1 : i32
    %46 = tpu.dynamic_rotate %34 by %c1_i32 dim 1 : vector<8x128xf32>, i32 -> vector<8x128xf32>
    %47 = arith.addf %34, %46 : vector<8x128xf32>
    %c2_i32 = arith.constant 2 : i32
    %48 = tpu.dynamic_rotate %47 by %c2_i32 dim 1 : vector<8x128xf32>, i32 -> vector<8x128xf32>
    %49 = arith.addf %47, %48 : vector<8x128xf32>
    %50 = vector.broadcast %1 : vector<8x1xf32> to vector<8x128xf32>
    %51 = arith.cmpf olt, %49, %50 : vector<8x128xf32>
    %52 = arith.andi %45, %51 : vector<8x128xi1>
    %cst_14 = arith.constant 1.000000e+00 : f32
    %cst_15 = arith.constant 0.000000e+00 : f32
    %53 = vector.broadcast %cst_14 : f32 to vector<8x128xf32>
    %54 = vector.broadcast %cst_15 : f32 to vector<8x128xf32>
    %55 = arith.select %52, %53, %54 : vector<8x128xi1>, vector<8x128xf32>
    %cst_16 = arith.constant dense<0.000000e+00> : vector<8xf32>
    %56 = vector.multi_reduction <add>, %55, %cst_16 [1] : vector<8x128xf32> to vector<8xf32>
    %57 = vector.shape_cast %56 : vector<8xf32> to vector<8x1xf32>
    %cst_17 = arith.constant 3.000000e+00 : f32
    %58 = vector.broadcast %cst_17 : f32 to vector<8x1xf32>
    %59 = arith.minimumf %57, %58 : vector<8x1xf32>
    %cst_18 = arith.constant 0.000000e+00 : f32
    %60 = vector.broadcast %cst_18 : f32 to vector<8x128xf32>
    %61 = arith.select %45, %42, %60 : vector<8x128xi1>, vector<8x128xf32>
    %c4_i32_19 = arith.constant 4 : i32
    %62 = tpu.dynamic_rotate %61 by %c4_i32_19 dim 1 : vector<8x128xf32>, i32 -> vector<8x128xf32>
    %63 = arith.addf %34, %62 : vector<8x128xf32>
    %c0_20 = arith.constant 0 : index
    %c0_21 = arith.constant 0 : index
    %64 = vector.load %arg3[%c0_20, %c0_21] : memref<8x128xf32, #tpu.memory_space<vmem>>, vector<8x128xf32>
    tpu.vector_store %arg3[%c0_20, %c0_21], %63 {strides = array<i32>} : memref<8x128xf32, #tpu.memory_space<vmem>>, vector<8x128xf32>,
    %c0_22 = arith.constant 0 : index
    %c8 = arith.constant 8 : index
    %65 = vector.load %arg3[%c0_22, %c8] : memref<8x128xf32, #tpu.memory_space<vmem>>, vector<8x1xf32>
    tpu.vector_store %arg3[%c0_22, %c8], %59 {strides = array<i32>} : memref<8x128xf32, #tpu.memory_space<vmem>>, vector<8x1xf32>,
    return
  }
  func.func @transform_0(%arg0: i32) -> (i32, i32) {
    %c0_i32 = arith.constant 0 : i32
    %c0_i32_0 = arith.constant 0 : i32
    return %arg0, %c0_i32 : i32, i32
  }
  func.func @transform_1(%arg0: i32) -> (i32, i32) {
    %c0_i32 = arith.constant 0 : i32
    %c0_i32_0 = arith.constant 0 : i32
    %c0_i32_1 = arith.constant 0 : i32
    return %c0_i32, %c0_i32_0 : i32, i32
  }
  func.func @transform_2(%arg0: i32) -> (i32, i32) {
    %c0_i32 = arith.constant 0 : i32
    %c0_i32_0 = arith.constant 0 : i32
    return %arg0, %c0_i32 : i32, i32
  }
}

</mosaic_0001>

<llo_original>
// kernel: actor_forward.1
$region0: #{actor_forward.1}
  #allocation0 [shape = 'u32[]', space=smem, size = 0x4, offset = 0x4, fixed_abs, tag = 'smem constant byte address 0x4 - core index']
  #allocation1 [shape = 'u32[72,128]{1,0:T(1,128)}', space=vmem, size = 0x9000, scoped, tag = 'internal scratch']
  %s0 = inlined_call_operand.vmem [shape: f32[8,128], index: 0, kind: input, shape index: {}]
  %s1 = inlined_call_operand.hbm [shape: bf16[400,128], index: 1, kind: input, shape index: {}]
  %s2 = inlined_call_operand.vmem [shape: f32[8,128], index: 2, kind: output, shape index: {}]
  %s3 = sld [smem:[#allocation0]]
  $region22: #{actor_forward.1} parent=0
    _
  %s5 = ssub.s32 1, %s3
  %s6 = scalar_select 0, %s5, %s3
  $region1: #{actor_forward.1} parent=0
    #allocation2 [shape = 'u8[102400]{0}', space=vmem, size = 0x19000, scoped, tag = 'input window, operand 1, single buffered']
    #allocation3 [shape = 's32[1]{0}', space=sflag, size = 0x4, scoped, tag = 'scoped memory for actor_forward.1']
    %7 = vsyncpa [#allocation3], 0
    // Predicated region
    $region2: #{actor_forward.1} parent=1 // pred_check
      _
    $region3: #{actor_forward.1} parent=1 // pred_check_branch
      %9 = sbr.rel (0) target = $region5
    $region4: #{actor_forward.1} parent=1 // pred_region
      _
    $region5: #{actor_forward.1} parent=1 // pred_fallthru
      _
    // Predicated region
    $region6: #{actor_forward.1} parent=1 // pred_check
      _
    $region7: #{actor_forward.1} parent=1 // pred_check_branch
      %11 = sbr.rel (0) target = $region9
    $region8: #{actor_forward.1} parent=1 // pred_region
      %13 = vsyncadd [#allocation3], 0
      %s14 = sshll.u32 %s1, 4
      %s15 = int_to_ptr.hbm [resolvable:$true] %s14
      %s16 = sshll.u32 [#allocation2], 4
      %s17 = int_to_ptr.vmem [resolvable:$true] %s16
      %22 = dma.hbm_to_vmem [thread:$0]  %s15, 3200, %s17, [#allocation3], 64, 64, 4
    $region9: #{actor_forward.1} parent=1 // pred_fallthru
      _
    // Predicated region
    $region10: #{actor_forward.1} parent=1 // pred_check
      _
    $region11: #{actor_forward.1} parent=1 // pred_check_branch
      %24 = sbr.rel (0) target = $region13
    $region12: #{actor_forward.1} parent=1 // pred_region
      %26 = dma.done [#allocation3], 3200
    $region13: #{actor_forward.1} parent=1 // pred_fallthru
      _
    %v27 = vld [vmem:[%s0] sm:$0xff]
    %v28 = vld [vmem:[#allocation2] sm:$0xf]
    %v29 = vld [vmem:[#allocation2 + $0x4] sm:$0xf]
    %v30 = vld [vmem:[#allocation2 + $0x8] sm:$0xf]
    %v31 = vld [vmem:[#allocation2 + $0xc] sm:$0xf]
    %v32 = vld [vmem:[#allocation2 + $0x10] sm:$0xf]
    %v33 = vld [vmem:[#allocation2 + $0x14] sm:$0xf]
    %v34 = vld [vmem:[#allocation2 + $0x18] sm:$0xf]
    %v35 = vld [vmem:[#allocation2 + $0x1c] sm:$0xf]
    %v36 = vld [vmem:[#allocation2 + $0x20] sm:$0xf]
    %v37 = vld [vmem:[#allocation2 + $0x24] sm:$0xf]
    %v38 = vld [vmem:[#allocation2 + $0x28] sm:$0xf]
    %v39 = vld [vmem:[#allocation2 + $0x2c] sm:$0xf]
    %v40 = vld [vmem:[#allocation2 + $0x30] sm:$0xf]
    %v41 = vld [vmem:[#allocation2 + $0x34] sm:$0xf]
    %v42 = vld [vmem:[#allocation2 + $0x38] sm:$0xf]
    %v43 = vld [vmem:[#allocation2 + $0x3c] sm:$0xf]
    %v44 = vld [vmem:[#allocation2 + $0x40] sm:$0xf]
    %v45 = vld [vmem:[#allocation2 + $0x44] sm:$0xf]
    %v46 = vld [vmem:[#allocation2 + $0x48] sm:$0xf]
    %v47 = vld [vmem:[#allocation2 + $0x4c] sm:$0xf]
    %v48 = vld [vmem:[#allocation2 + $0x50] sm:$0xf]
    %v49 = vld [vmem:[#allocation2 + $0x54] sm:$0xf]
    %v50 = vld [vmem:[#allocation2 + $0x58] sm:$0xf]
    %v51 = vld [vmem:[#allocation2 + $0x5c] sm:$0xf]
    %v52 = vld [vmem:[#allocation2 + $0x60] sm:$0xf]
    %v53 = vld [vmem:[#allocation2 + $0x64] sm:$0xf]
    %v54 = vld [vmem:[#allocation2 + $0x68] sm:$0xf]
    %v55 = vld [vmem:[#allocation2 + $0x6c] sm:$0xf]
    %v56 = vld [vmem:[#allocation2 + $0x70] sm:$0xf]
    %v57 = vld [vmem:[#allocation2 + $0x74] sm:$0xf]
    %v58 = vld [vmem:[#allocation2 + $0x78] sm:$0xf]
    %v59 = vld [vmem:[#allocation2 + $0x7c] sm:$0xf]
    %v60 = vld [vmem:[#allocation2 + $0x80] sm:$0xf]
    %v61 = vld [vmem:[#allocation2 + $0x84] sm:$0xf]
    %v62 = vld [vmem:[#allocation2 + $0x88] sm:$0xf]
    %v63 = vld [vmem:[#allocation2 + $0x8c] sm:$0xf]
    %v64 = vld [vmem:[#allocation2 + $0x90] sm:$0xf]
    %v65 = vld [vmem:[#allocation2 + $0x94] sm:$0xf]
    %v66 = vld [vmem:[#allocation2 + $0x98] sm:$0xf]
    %v67 = vld [vmem:[#allocation2 + $0x9c] sm:$0xf]
    %v68 = vld [vmem:[#allocation2 + $0xa0] sm:$0xf]
    %v69 = vld [vmem:[#allocation2 + $0xa4] sm:$0xf]
    %v70 = vld [vmem:[#allocation2 + $0xa8] sm:$0xf]
    %v71 = vld [vmem:[#allocation2 + $0xac] sm:$0xf]
    %v72 = vld [vmem:[#allocation2 + $0xb0] sm:$0xf]
    %v73 = vld [vmem:[#allocation2 + $0xb4] sm:$0xf]
    %v74 = vld [vmem:[#allocation2 + $0xb8] sm:$0xf]
    %v75 = vld [vmem:[#allocation2 + $0xbc] sm:$0xf]
    %v76 = vld [vmem:[#allocation2 + $0xc0] sm:$0xf]
    %v77 = vunpack.c.l.bf16 %v76
    %v78 = vpack.c.bf16 %v27, %v27
    %v79 = vperm.slane %v77, 0
    %v96 = vunpack.c.l.b16 %v28
    %v97 = vunpack.c.l.b16 %v29
    %v98 = vunpack.c.l.b16 %v30
    %v99 = vunpack.c.l.b16 %v31
    %v100 = vunpack.c.l.b16 %v32
    %v101 = vunpack.c.l.b16 %v33
    %v102 = vunpack.c.l.b16 %v34
    %v103 = vunpack.c.l.b16 %v35
    %v104 = vunpack.c.l.b16 %v36
    %v105 = vunpack.c.l.b16 %v37
    %v106 = vunpack.c.l.b16 %v38
    %v107 = vunpack.c.l.b16 %v39
    %v108 = vunpack.c.l.b16 %v40
    %v109 = vunpack.c.l.b16 %v41
    %v110 = vunpack.c.l.b16 %v42
    %v111 = vunpack.c.l.b16 %v43
    %v112 = vpack.c.b16 %v97, %v96
    %v113 = vpack.c.b16 %v99, %v98
    %v114 = vpack.c.b16 %v101, %v100
    %v115 = vpack.c.b16 %v103, %v102
    %v116 = vpack.c.b16 %v105, %v104
    %v117 = vpack.c.b16 %v107, %v106
    %v118 = vpack.c.b16 %v109, %v108
    %v119 = vpack.c.b16 %v111, %v110
    %128 = vmatpush.bf16.msra.mxu0 %v119
    %129 = vmatpush.bf16.msra.mxu0 %v118
    %130 = vmatpush.bf16.msra.mxu0 %v117
    %131 = vmatpush.bf16.msra.mxu0 %v116
    %132 = vmatpush.bf16.msra.mxu0 %v115
    %133 = vmatpush.bf16.msra.mxu0 %v114
    %134 = vmatpush.bf16.msra.mxu0 %v113
    %135 = vmatpush.bf16.msra.mxu0 %v112
    %136 = vmatmul.bf16.gmra.mxu0 %v78
    %v137 = vpop.f32.mrf.mxu0
    %v138 = vadd.f32 %v79, %v137
    %v139 = vpop.f32.mrf.mxu0
    %140 = vdwg.mxu0
    %v141 = vmax.f32 %v138, 0.0
    %v142 = vpack.c.bf16 %v141, %v141
    %v143 = vperm.slane %v77, 1
    %v160 = vunpack.c.l.b16 %v44
    %v161 = vunpack.c.l.b16 %v45
    %v162 = vunpack.c.l.b16 %v46
    %v163 = vunpack.c.l.b16 %v47
    %v164 = vunpack.c.l.b16 %v48
    %v165 = vunpack.c.l.b16 %v49
    %v166 = vunpack.c.l.b16 %v50
    %v167 = vunpack.c.l.b16 %v51
    %v168 = vunpack.c.l.b16 %v52
    %v169 = vunpack.c.l.b16 %v53
    %v170 = vunpack.c.l.b16 %v54
    %v171 = vunpack.c.l.b16 %v55
    %v172 = vunpack.c.l.b16 %v56
    %v173 = vunpack.c.l.b16 %v57
    %v174 = vunpack.c.l.b16 %v58
    %v175 = vunpack.c.l.b16 %v59
    %v176 = vpack.c.b16 %v161, %v160
    %v177 = vpack.c.b16 %v163, %v162
    %v178 = vpack.c.b16 %v165, %v164
    %v179 = vpack.c.b16 %v167, %v166
    %v180 = vpack.c.b16 %v169, %v168
    %v181 = vpack.c.b16 %v171, %v170
    %v182 = vpack.c.b16 %v173, %v172
    %v183 = vpack.c.b16 %v175, %v174
    %192 = vmatpush.bf16.msra.mxu0 %v183
    %193 = vmatpush.bf16.msra.mxu0 %v182
    %194 = vmatpush.bf16.msra.mxu0 %v181
    %195 = vmatpush.bf16.msra.mxu0 %v180
    %196 = vmatpush.bf16.msra.mxu0 %v179
    %197 = vmatpush.bf16.msra.mxu0 %v178
    %198 = vmatpush.bf16.msra.mxu0 %v177
    %199 = vmatpush.bf16.msra.mxu0 %v176
    %200 = vmatmul.bf16.gmra.mxu0 %v142
    %v201 = vpop.f32.mrf.mxu0
    %v202 = vadd.f32 %v143, %v201
    %v203 = vpop.f32.mrf.mxu0
    %204 = vdwg.mxu0
    %v205 = vmax.f32 %v202, 0.0
    %v206 = vpack.c.bf16 %v205, %v205
    %v207 = vperm.slane %v77, 2
    %v224 = vunpack.c.l.b16 %v60
    %v225 = vunpack.c.l.b16 %v61
    %v226 = vunpack.c.l.b16 %v62
    %v227 = vunpack.c.l.b16 %v63
    %v228 = vunpack.c.l.b16 %v64
    %v229 = vunpack.c.l.b16 %v65
    %v230 = vunpack.c.l.b16 %v66
    %v231 = vunpack.c.l.b16 %v67
    %v232 = vunpack.c.l.b16 %v68
    %v233 = vunpack.c.l.b16 %v69
    %v234 = vunpack.c.l.b16 %v70
    %v235 = vunpack.c.l.b16 %v71
    %v236 = vunpack.c.l.b16 %v72
    %v237 = vunpack.c.l.b16 %v73
    %v238 = vunpack.c.l.b16 %v74
    %v239 = vunpack.c.l.b16 %v75
    %v240 = vpack.c.b16 %v225, %v224
    %v241 = vpack.c.b16 %v227, %v226
    %v242 = vpack.c.b16 %v229, %v228
    %v243 = vpack.c.b16 %v231, %v230
    %v244 = vpack.c.b16 %v233, %v232
    %v245 = vpack.c.b16 %v235, %v234
    %v246 = vpack.c.b16 %v237, %v236
    %v247 = vpack.c.b16 %v239, %v238
    %256 = vmatpush.bf16.msra.mxu0 %v247
    %257 = vmatpush.bf16.msra.mxu0 %v246
    %258 = vmatpush.bf16.msra.mxu0 %v245
    %259 = vmatpush.bf16.msra.mxu0 %v244
    %260 = vmatpush.bf16.msra.mxu0 %v243
    %261 = vmatpush.bf16.msra.mxu0 %v242
    %262 = vmatpush.bf16.msra.mxu0 %v241
    %263 = vmatpush.bf16.msra.mxu0 %v240
    %264 = vmatmul.bf16.gmra.mxu0 %v206
    %v265 = vpop.f32.mrf.mxu0
    %v266 = vadd.f32 %v207, %v265
    %v267 = vpop.f32.mrf.mxu0
    %268 = vdwg.mxu0
    %269 = vmax.xlane.f32.xlu0 %v266
    %v270 = vpop.xlane.xlu0 %269
    %v271 = vsub.f32 %v266, %v270
    %v272 = vmul.f32 %v271, 1.442695
    %v273 = vpow.pop %v272
    %274 = vadd.xlane.f32.xlu0 %v273
    %v275 = vpop.xlane.xlu0 %274
    %v276 = vrcp.pop %v275
    %v277 = vmul.f32 %v275, %v276
    %v278 = vsub.f32 1.0, %v277
    %v279 = vmul.f32 %v276, %v278
    %v280 = vadd.f32 %v276, %v279
    %vm281 = vweird.f32 %v275
    %vm282 = vweird.f32 %v276
    %vm283 = vmor %vm281, %vm282
    %v284 = vsel %vm283, %v276, %v280
    %v285 = vand.u32 2147483647, %v275
    %vm286 = vcmp.eq.f32.partialorder %v285, 8.507059e+37
    %v287 = vand.u32 %v275, 2147483648
    %v288 = vor.u32 1.1754944e-38, %v287
    %v289 = vsel %vm286, %v288, %v284
    %v290 = vmul.f32 %v273, %v289
    %v291 = vlog2.pop %v275
    %v292 = vmul.f32 %v291, 0.6931472
    %v293 = vsub.f32 %v271, %v292
    %vm294 = vcmp.eq.f32.partialorder %v290, 0.0
    %v295 = vsel %vm294, -18.420681, %v293
    %v296 = vlaneseq
    %v297 = vand.u32 %v296, 127
    %vm298 = vcmp.lt.s32.totalorder %v297, 4
    %299 = vrot.lane.b32.xlu0 %v290, 1
    %v300 = vpop.permute.xlu0 %299
    %v301 = vadd.f32 %v290, %v300
    %302 = vrot.lane.b32.xlu0 %v301, 2
    %v303 = vpop.permute.xlu0 %302
    %v304 = vadd.f32 %v301, %v303
    %306 = vset.pattern.permute.xlu0 127
    %307 = vperm.xlu0 %306, %v27
    %v308 = vpop.permute.xlu0 %307
    %vm310 = vcmp.lt.f32.partialorder %v304, %v308
    %vm311 = vmand %vm298, %vm310
    %v312 = vsel %vm311, 1.0, 0.0
    %313 = vadd.xlane.f32.xlu0 %v312
    %v314 = vpop.xlane.xlu0 %313
    %v315 = vmin.f32 %v314, 3.0
    %v316 = vsel %vm298, %v295, 0.0
    %317 = vrot.lane.b32.xlu0 %v316, 4
    %v318 = vpop.permute.xlu0 %317
    %v319 = vadd.f32 %v290, %v318
    %320 = vst [vmem:[%s2] sm:$0xff] %v319
    %vm321 = vcmask 72768
    %322 = vst.msk [vmem:[%s2] sm:$0xff] %vm321, %v315
    // Predicated region
    $region14: #{actor_forward.1} parent=1 // pred_check
      _
    $region15: #{actor_forward.1} parent=1 // pred_check_branch
      %324 = sbr.rel (0) target = $region17
    $region16: #{actor_forward.1} parent=1 // pred_region
      _
    $region17: #{actor_forward.1} parent=1 // pred_fallthru
      _
    // Predicated region
    $region18: #{actor_forward.1} parent=1 // pred_check
      _
    $region19: #{actor_forward.1} parent=1 // pred_check_branch
      %326 = sbr.rel (0) target = $region21
    $region20: #{actor_forward.1} parent=1 // pred_region
      _
    $region21: #{actor_forward.1} parent=1 // pred_fallthru
      _
    %327 = vsyncpa [#allocation3], 1

</llo_original>
